<compile_context>
chip_gen: v6e
topology: v6e:2x2x1
jax: 0.10.0
libtpu: 0.0.40
codegen_flags: <defaults>
</compile_context>

<pallas_src>
import math
from functools import partial

import jax
import jax.numpy as jnp
from jax.experimental import pallas as pl
from jax.experimental.pallas import tpu as pltpu


def _student_lr_kernel(x_ref, adj_ref, w1_ref, b1_ref, w2_ref, b2_ref,
                       w3_ref, b3_ref, o_ref, *, timepoints):
    # Hoisted loads: adj and the gc3 parameters are reused every timepoint.
    adj = adj_ref[...]                       # (N, N)
    w3 = w3_ref[...]                         # (nhid3, nhid3)
    b3 = b3_ref[...]                         # (1, nhid3) — broadcast over rows

    # gc1 + relu   (dropout = identity at inference)
    h = jnp.dot(x_ref[...], w1_ref[...], preferred_element_type=jnp.float32)
    h = jnp.dot(adj, h, preferred_element_type=jnp.float32) + b1_ref[...]
    h = jnp.maximum(h, 0.0)

    # gc2 + relu
    h = jnp.dot(h, w2_ref[...], preferred_element_type=jnp.float32)
    h = jnp.dot(adj, h, preferred_element_type=jnp.float32) + b2_ref[...]
    h = jnp.maximum(h, 0.0)

    preds = [h]

    # gc3 + relu, repeated — static unroll keeps the sequential chain entirely
    # in vregs; shared (adj, w3, b3) are not re-loaded or re-broadcast.
    for _ in range(1, timepoints):
        h = jnp.dot(h, w3, preferred_element_type=jnp.float32)
        h = jnp.dot(adj, h, preferred_element_type=jnp.float32) + b3
        h = jnp.maximum(h, 0.0)
        preds.append(h)

    # One contiguous store of the whole (timepoints, N, nhid3) output slab.
    o_ref[...] = jnp.stack(preds, axis=0).astype(o_ref.dtype)


@partial(jax.jit, static_argnames=("timepoints",))
def student_lr_fused(x, adj, params, timepoints):
    """Run the whole Student_LR forward (eval mode) in one Pallas kernel.

    Returns a stacked array of shape (timepoints, N, nhid3).
    """
    (w1, b1), (w2, b2), (w3, b3) = params
    n = x.shape[0]
    nhid3 = w3.shape[1]
    vmem = pl.BlockSpec(memory_space=pltpu.MemorySpace.VMEM)
    return pl.pallas_call(
        partial(_student_lr_kernel, timepoints=timepoints),
        out_shape=jax.ShapeDtypeStruct((timepoints, n, nhid3), jnp.float32),
        in_specs=[vmem] * 8,   # x, adj, w1, b1, w2, b2, w3, b3 — full-array VMEM blocks
        out_specs=vmem,
    )(x.astype(jnp.float32), adj.astype(jnp.float32),
      w1, b1.reshape(1, -1),
      w2, b2.reshape(1, -1),
      w3, b3.reshape(1, -1))


def student_lr_forward(x, adj, params, timepoints):
    """Reproduces Student_LR.forward (eval mode): list of `timepoints`
    arrays, each of shape (N, nhid3)."""
    # TODO(synk): F.dropout in training mode not implemented (inference semantics used).
    stacked = student_lr_fused(x, adj, params, timepoints)
    return [stacked[t] for t in range(timepoints)]


def init_gcn_params(key, in_features, out_features):
    """Matches GCN.reset_parameters: uniform(-stdv, stdv), stdv = 1/sqrt(out)."""
    stdv = 1.0 / math.sqrt(out_features)
    kw, kb = jax.random.split(key)
    w = jax.random.uniform(kw, (in_features, out_features), jnp.float32, -stdv, stdv)
    b = jax.random.uniform(kb, (out_features,), jnp.float32, -stdv, stdv)
    return w, b


if __name__ == "__main__":
    # Small, forward-consistent shapes.
    N = 8          # number of graph nodes (brain ROIs)
    nhid1 = 32
    nhid2 = 16
    nhid3 = 8
    timepoints = 3
    dropout = 0.5  # unused at inference

    key = jax.random.PRNGKey(0)
    kx, kadj, k1, k2, k3 = jax.random.split(key, 5)

    x = jax.random.normal(kx, (N, nhid1), jnp.float32)

    # Dense symmetric row-normalized adjacency.
    a = jax.random.uniform(kadj, (N, N), jnp.float32)
    a = 0.5 * (a + a.T) + jnp.eye(N, dtype=jnp.float32)
    adj = a / jnp.sum(a, axis=1, keepdims=True)

    params = (
        init_gcn_params(k1, nhid1, nhid2),
        init_gcn_params(k2, nhid2, nhid3),
        init_gcn_params(k3, nhid3, nhid3),
    )

    # Single fused kernel launch for the entire forward pass.
    stacked = jax.block_until_ready(student_lr_fused(x, adj, params, timepoints))
    preds = [stacked[t] for t in range(timepoints)]

    # Sanity check against plain-JAX reference.
    def ref_gcn(x, adj, w, b):
        return jnp.maximum(adj @ (x @ w) + b, 0.0)

    r = ref_gcn(x, adj, *params[0])
    r = ref_gcn(r, adj, *params[1])
    refs = [r]
    for _ in range(1, timepoints):
        r = ref_gcn(r, adj, *params[2])
        refs.append(r)

    assert stacked.shape == (timepoints, N, nhid3)
    for p, rr in zip(preds, refs):
        assert p.shape == (N, nhid3)
        assert jnp.allclose(p, rr, atol=1e-5), "mismatch vs reference"

    print("KERNEL_OK")
</pallas_src>

<mosaic_0001>
module attributes {stable_mosaic.version = 11 : i64} {
  func.func @_student_lr_kernel(%arg0: memref<8x32xf32, #tpu.memory_space<vmem>>, %arg1: memref<8x8xf32, #tpu.memory_space<vmem>>, %arg2: memref<32x16xf32, #tpu.memory_space<vmem>>, %arg3: memref<1x16xf32, #tpu.memory_space<vmem>>, %arg4: memref<16x8xf32, #tpu.memory_space<vmem>>, %arg5: memref<1x8xf32, #tpu.memory_space<vmem>>, %arg6: memref<8x8xf32, #tpu.memory_space<vmem>>, %arg7: memref<1x8xf32, #tpu.memory_space<vmem>>, %arg8: memref<3x8x8xf32, #tpu.memory_space<vmem>>) attributes {dimension_semantics = [], scalar_prefetch = 0 : i64, scratch_operands = 0 : i64, tpu.core_type = #tpu.core_type<tc>} {
    %c0 = arith.constant 0 : index
    %c0_0 = arith.constant 0 : index
    %0 = vector.load %arg1[%c0, %c0_0] : memref<8x8xf32, #tpu.memory_space<vmem>>, vector<8x8xf32>
    %c0_1 = arith.constant 0 : index
    %c0_2 = arith.constant 0 : index
    %1 = vector.load %arg6[%c0_1, %c0_2] : memref<8x8xf32, #tpu.memory_space<vmem>>, vector<8x8xf32>
    %c0_3 = arith.constant 0 : index
    %c0_4 = arith.constant 0 : index
    %2 = vector.load %arg7[%c0_3, %c0_4] : memref<1x8xf32, #tpu.memory_space<vmem>>, vector<1x8xf32>
    %c0_5 = arith.constant 0 : index
    %c0_6 = arith.constant 0 : index
    %3 = vector.load %arg0[%c0_5, %c0_6] : memref<8x32xf32, #tpu.memory_space<vmem>>, vector<8x32xf32>
    %c0_7 = arith.constant 0 : index
    %c0_8 = arith.constant 0 : index
    %4 = vector.load %arg2[%c0_7, %c0_8] : memref<32x16xf32, #tpu.memory_space<vmem>>, vector<32x16xf32>
    %cst = arith.constant dense<0.000000e+00> : vector<8x16xf32>
    %5 = tpu.matmul %3, %4, %cst {dimension_numbers = #tpu.dot_dimension_numbers<[1], [0], [0], [1], [0, 0, 1, 1], [], []>} : vector<8x32xf32>, vector<32x16xf32>, vector<8x16xf32> -> vector<8x16xf32>
    %cst_9 = arith.constant dense<0.000000e+00> : vector<8x16xf32>
    %6 = tpu.matmul %0, %5, %cst_9 {dimension_numbers = #tpu.dot_dimension_numbers<[1], [0], [0], [1], [0, 0, 1, 1], [], []>} : vector<8x8xf32>, vector<8x16xf32>, vector<8x16xf32> -> vector<8x16xf32>
    %c0_10 = arith.constant 0 : index
    %c0_11 = arith.constant 0 : index
    %7 = vector.load %arg3[%c0_10, %c0_11] : memref<1x16xf32, #tpu.memory_space<vmem>>, vector<1x16xf32>
    %8 = vector.broadcast %7 : vector<1x16xf32> to vector<8x16xf32>
    %9 = arith.addf %6, %8 : vector<8x16xf32>
    %cst_12 = arith.constant 0.000000e+00 : f32
    %10 = vector.broadcast %cst_12 : f32 to vector<8x16xf32>
    %11 = arith.maximumf %9, %10 : vector<8x16xf32>
    %c0_13 = arith.constant 0 : index
    %c0_14 = arith.constant 0 : index
    %12 = vector.load %arg4[%c0_13, %c0_14] : memref<16x8xf32, #tpu.memory_space<vmem>>, vector<16x8xf32>
    %cst_15 = arith.constant dense<0.000000e+00> : vector<8x8xf32>
    %13 = tpu.matmul %11, %12, %cst_15 {dimension_numbers = #tpu.dot_dimension_numbers<[1], [0], [0], [1], [0, 0, 1, 1], [], []>} : vector<8x16xf32>, vector<16x8xf32>, vector<8x8xf32> -> vector<8x8xf32>
    %cst_16 = arith.constant dense<0.000000e+00> : vector<8x8xf32>
    %14 = tpu.matmul %0, %13, %cst_16 {dimension_numbers = #tpu.dot_dimension_numbers<[1], [0], [0], [1], [0, 0, 1, 1], [], []>} : vector<8x8xf32>, vector<8x8xf32>, vector<8x8xf32> -> vector<8x8xf32>
    %c0_17 = arith.constant 0 : index
    %c0_18 = arith.constant 0 : index
    %15 = vector.load %arg5[%c0_17, %c0_18] : memref<1x8xf32, #tpu.memory_space<vmem>>, vector<1x8xf32>
    %16 = vector.broadcast %15 : vector<1x8xf32> to vector<8x8xf32>
    %17 = arith.addf %14, %16 : vector<8x8xf32>
    %cst_19 = arith.constant 0.000000e+00 : f32
    %18 = vector.broadcast %cst_19 : f32 to vector<8x8xf32>
    %19 = arith.maximumf %17, %18 : vector<8x8xf32>
    %cst_20 = arith.constant dense<0.000000e+00> : vector<8x8xf32>
    %20 = tpu.matmul %19, %1, %cst_20 {dimension_numbers = #tpu.dot_dimension_numbers<[1], [0], [0], [1], [0, 0, 1, 1], [], []>} : vector<8x8xf32>, vector<8x8xf32>, vector<8x8xf32> -> vector<8x8xf32>
    %cst_21 = arith.constant dense<0.000000e+00> : vector<8x8xf32>
    %21 = tpu.matmul %0, %20, %cst_21 {dimension_numbers = #tpu.dot_dimension_numbers<[1], [0], [0], [1], [0, 0, 1, 1], [], []>} : vector<8x8xf32>, vector<8x8xf32>, vector<8x8xf32> -> vector<8x8xf32>
    %22 = vector.broadcast %2 : vector<1x8xf32> to vector<8x8xf32>
    %23 = arith.addf %21, %22 : vector<8x8xf32>
    %cst_22 = arith.constant 0.000000e+00 : f32
    %24 = vector.broadcast %cst_22 : f32 to vector<8x8xf32>
    %25 = arith.maximumf %23, %24 : vector<8x8xf32>
    %cst_23 = arith.constant dense<0.000000e+00> : vector<8x8xf32>
    %26 = tpu.matmul %25, %1, %cst_23 {dimension_numbers = #tpu.dot_dimension_numbers<[1], [0], [0], [1], [0, 0, 1, 1], [], []>} : vector<8x8xf32>, vector<8x8xf32>, vector<8x8xf32> -> vector<8x8xf32>
    %cst_24 = arith.constant dense<0.000000e+00> : vector<8x8xf32>
    %27 = tpu.matmul %0, %26, %cst_24 {dimension_numbers = #tpu.dot_dimension_numbers<[1], [0], [0], [1], [0, 0, 1, 1], [], []>} : vector<8x8xf32>, vector<8x8xf32>, vector<8x8xf32> -> vector<8x8xf32>
    %28 = vector.broadcast %2 : vector<1x8xf32> to vector<8x8xf32>
    %29 = arith.addf %27, %28 : vector<8x8xf32>
    %cst_25 = arith.constant 0.000000e+00 : f32
    %30 = vector.broadcast %cst_25 : f32 to vector<8x8xf32>
    %31 = arith.maximumf %29, %30 : vector<8x8xf32>
    %32 = vector.shape_cast %19 : vector<8x8xf32> to vector<1x8x8xf32>
    %33 = vector.shape_cast %25 : vector<8x8xf32> to vector<1x8x8xf32>
    %34 = vector.shape_cast %31 : vector<8x8xf32> to vector<1x8x8xf32>
    %35 = tpu.concatenate %32, %33, %34 in 0 : vector<1x8x8xf32>, vector<1x8x8xf32>, vector<1x8x8xf32> -> vector<3x8x8xf32>
    %c0_26 = arith.constant 0 : index
    %c0_27 = arith.constant 0 : index
    %c0_28 = arith.constant 0 : index
    %36 = vector.load %arg8[%c0_26, %c0_27, %c0_28] : memref<3x8x8xf32, #tpu.memory_space<vmem>>, vector<3x8x8xf32>
    tpu.vector_store %arg8[%c0_26, %c0_27, %c0_28], %35 {strides = array<i32>} : memref<3x8x8xf32, #tpu.memory_space<vmem>>, vector<3x8x8xf32>,
    return
  }
}

</mosaic_0001>

<llo_original>
// kernel: student_lr_fused.1
$region0: #{student_lr_fused.1}
  #allocation0 [shape = 'u32[]', space=smem, size = 0x4, offset = 0x4, fixed_abs, tag = 'smem constant byte address 0x4 - core index']
  #allocation1 [shape = 'u32[144,128]{1,0:T(1,128)}', space=vmem, size = 0x12000, scoped, tag = 'internal scratch']
  %s0 = inlined_call_operand.vmem [shape: f32[8,32], index: 0, kind: input, shape index: {}]
  %s1 = inlined_call_operand.vmem [shape: f32[8,8], index: 1, kind: input, shape index: {}]
  %s2 = inlined_call_operand.vmem [shape: f32[32,16], index: 2, kind: input, shape index: {}]
  %s3 = inlined_call_operand.vmem [shape: f32[1,16], index: 3, kind: input, shape index: {}]
  %s4 = inlined_call_operand.vmem [shape: f32[16,8], index: 4, kind: input, shape index: {}]
  %s5 = inlined_call_operand.vmem [shape: f32[1,8], index: 5, kind: input, shape index: {}]
  %s6 = inlined_call_operand.vmem [shape: f32[8,8], index: 6, kind: input, shape index: {}]
  %s7 = inlined_call_operand.vmem [shape: f32[1,8], index: 7, kind: input, shape index: {}]
  %s8 = inlined_call_operand.hbm [shape: f32[3,8,8], index: 8, kind: output, shape index: {}]
  %s9 = sld [smem:[#allocation0]]
  $region42: #{student_lr_fused.1} parent=0
    _
  %s11 = ssub.s32 1, %s9
  %s12 = scalar_select 0, %s11, %s9
  $region1: #{student_lr_fused.1} parent=0
    #allocation2 [shape = 'u8[12288]{0}', space=vmem, size = 0x3000, scoped, tag = 'output window, operand 0, single buffered']
    #allocation3 [shape = 's32[1]{0}', space=sflag, size = 0x4, scoped, tag = 'scoped memory for student_lr_fused.1']
    %13 = vsyncpa [#allocation3], 0
    // Predicated region
    $region2: #{student_lr_fused.1} parent=1 // pred_check
      _
    $region3: #{student_lr_fused.1} parent=1 // pred_check_branch
      %15 = sbr.rel (0) target = $region5
    $region4: #{student_lr_fused.1} parent=1 // pred_region
      _
    $region5: #{student_lr_fused.1} parent=1 // pred_fallthru
      _
    // Predicated region
    $region6: #{student_lr_fused.1} parent=1 // pred_check
      _
    $region7: #{student_lr_fused.1} parent=1 // pred_check_branch
      %17 = sbr.rel (0) target = $region9
    $region8: #{student_lr_fused.1} parent=1 // pred_region
      _
    $region9: #{student_lr_fused.1} parent=1 // pred_fallthru
      _
    // Predicated region
    $region10: #{student_lr_fused.1} parent=1 // pred_check
      _
    $region11: #{student_lr_fused.1} parent=1 // pred_check_branch
      %19 = sbr.rel (0) target = $region13
    $region12: #{student_lr_fused.1} parent=1 // pred_region
      _
    $region13: #{student_lr_fused.1} parent=1 // pred_fallthru
      _
    // Predicated region
    $region14: #{student_lr_fused.1} parent=1 // pred_check
      _
    $region15: #{student_lr_fused.1} parent=1 // pred_check_branch
      %21 = sbr.rel (0) target = $region17
    $region16: #{student_lr_fused.1} parent=1 // pred_region
      _
    $region17: #{student_lr_fused.1} parent=1 // pred_fallthru
      _
    // Predicated region
    $region18: #{student_lr_fused.1} parent=1 // pred_check
      _
    $region19: #{student_lr_fused.1} parent=1 // pred_check_branch
      %23 = sbr.rel (0) target = $region21
    $region20: #{student_lr_fused.1} parent=1 // pred_region
      _
    $region21: #{student_lr_fused.1} parent=1 // pred_fallthru
      _
    // Predicated region
    $region22: #{student_lr_fused.1} parent=1 // pred_check
      _
    $region23: #{student_lr_fused.1} parent=1 // pred_check_branch
      %25 = sbr.rel (0) target = $region25
    $region24: #{student_lr_fused.1} parent=1 // pred_region
      _
    $region25: #{student_lr_fused.1} parent=1 // pred_fallthru
      _
    // Predicated region
    $region26: #{student_lr_fused.1} parent=1 // pred_check
      _
    $region27: #{student_lr_fused.1} parent=1 // pred_check_branch
      %27 = sbr.rel (0) target = $region29
    $region28: #{student_lr_fused.1} parent=1 // pred_region
      _
    $region29: #{student_lr_fused.1} parent=1 // pred_fallthru
      _
    // Predicated region
    $region30: #{student_lr_fused.1} parent=1 // pred_check
      _
    $region31: #{student_lr_fused.1} parent=1 // pred_check_branch
      %29 = sbr.rel (0) target = $region33
    $region32: #{student_lr_fused.1} parent=1 // pred_region
      _
    $region33: #{student_lr_fused.1} parent=1 // pred_fallthru
      _
    %v30 = vld [vmem:[%s1] sm:$0xff]
    %v31 = vld [vmem:[%s6] sm:$0xff]
    %v32 = vld [vmem:[%s7] sm:$0x1]
    %v33 = vld [vmem:[%s0] sm:$0xff]
    %v34 = vld [vmem:[%s2] sm:$0xff]
    %v35 = vld [vmem:[%s2 + $0x8] sm:$0xff]
    %v36 = vld [vmem:[%s2 + $0x10] sm:$0xff]
    %v37 = vld [vmem:[%s2 + $0x18] sm:$0xff]
    %vm38 = vcmask 261120
    %v40 = vsel %vm38, %v33, 0
    %42 = vmatprep.subr.mxu0 0.0
    %43 = vmatpush1.msra.mxu0 0.0
    %44 = vmatprep.subr.mxu0 0.0
    %45 = vmatpush1.msra.mxu0 0.0
    %46 = vmatprep.subr.mxu0 0.0
    %47 = vmatpush1.msra.mxu0 0.0
    %48 = vmatprep.subr.mxu0 0.0
    %49 = vmatpush1.msra.mxu0 0.0
    %50 = vmatprep.subr.mxu0 0.0
    %51 = vmatpush1.msra.mxu0 0.0
    %52 = vmatprep.subr.mxu0 0.0
    %53 = vmatpush1.msra.mxu0 0.0
    %54 = vmatprep.subr.mxu0 0.0
    %55 = vmatpush1.msra.mxu0 0.0
    %56 = vmatprep.subr.mxu0 0.0
    %57 = vmatpush1.msra.mxu0 0.0
    %58 = vmatprep.subr.mxu0 0.0
    %59 = vmatpush1.msra.mxu0 0.0
    %60 = vmatprep.subr.mxu0 0.0
    %61 = vmatpush1.msra.mxu0 0.0
    %62 = vmatprep.subr.mxu0 0.0
    %63 = vmatpush1.msra.mxu0 0.0
    %64 = vmatprep.subr.mxu0 0.0
    %65 = vmatpush1.msra.mxu0 0.0
    %66 = vmatprep.subr.mxu0 0.0
    %67 = vmatpush1.msra.mxu0 %v37
    %68 = vmatprep.subr.mxu0 0.0
    %69 = vmatpush1.msra.mxu0 %v36
    %70 = vmatprep.subr.mxu0 0.0
    %71 = vmatpush1.msra.mxu0 %v35
    %72 = vmatprep.subr.mxu0 0.0
    %73 = vmatpush1.msra.mxu0 %v34
    %74 = vmatprep.subr.mxu0 0.0
    %75 = vmatpush2.msra.mxu0 0.0
    %76 = vmatprep.subr.mxu0 0.0
    %77 = vmatpush2.msra.mxu0 0.0
    %78 = vmatprep.subr.mxu0 0.0
    %79 = vmatpush2.msra.mxu0 0.0
    %80 = vmatprep.subr.mxu0 0.0
    %81 = vmatpush2.msra.mxu0 0.0
    %82 = vmatprep.subr.mxu0 0.0
    %83 = vmatpush2.msra.mxu0 0.0
    %84 = vmatprep.subr.mxu0 0.0
    %85 = vmatpush2.msra.mxu0 0.0
    %86 = vmatprep.subr.mxu0 0.0
    %87 = vmatpush2.msra.mxu0 0.0
    %88 = vmatprep.subr.mxu0 0.0
    %89 = vmatpush2.msra.mxu0 0.0
    %90 = vmatprep.subr.mxu0 0.0
    %91 = vmatpush2.msra.mxu0 0.0
    %92 = vmatprep.subr.mxu0 0.0
    %93 = vmatpush2.msra.mxu0 0.0
    %94 = vmatprep.subr.mxu0 0.0
    %95 = vmatpush2.msra.mxu0 0.0
    %96 = vmatprep.subr.mxu0 0.0
    %97 = vmatpush2.msra.mxu0 0.0
    %98 = vmatprep.subr.mxu0 0.0
    %99 = vmatpush2.msra.mxu0 0.0
    %100 = vmatprep.subr.mxu0 0.0
    %101 = vmatpush2.msra.mxu0 0.0
    %102 = vmatprep.subr.mxu0 0.0
    %103 = vmatpush2.msra.mxu0 0.0
    %104 = vmatprep.subr.mxu0 0.0
    %105 = vmatpush2.msra.mxu0 0.0
    %106 = vmatprep.mubr.f32.mxu0 0.0
    %107 = vmatmul.mubr.f32.gmra.mxu0 %v40
    %v108 = vpop.f32.mrf.mxu0
    %v109 = vadd.f32 0.0, %v108
    %v110 = vpop.f32.mrf.mxu0
    %111 = vdwg.mxu0
    %v112 = vld [vmem:[%s3] sm:$0x1]
    %v114 = vlaneseq
    %v115 = vshrl.u32 %v114, 7
    %v116 = vsub.s32 0, %v115
    %v117 = vrot.slane %v112, %v116
    %vm119 = vcmask 64512
    %v121 = vsel %vm119, %v30, 0
    %123 = vmatprep.subr.mxu0 0.0
    %124 = vmatpush1.msra.mxu0 0.0
    %125 = vmatprep.subr.mxu0 0.0
    %126 = vmatpush1.msra.mxu0 0.0
    %127 = vmatprep.subr.mxu0 0.0
    %128 = vmatpush1.msra.mxu0 0.0
    %129 = vmatprep.subr.mxu0 0.0
    %130 = vmatpush1.msra.mxu0 0.0
    %131 = vmatprep.subr.mxu0 0.0
    %132 = vmatpush1.msra.mxu0 0.0
    %133 = vmatprep.subr.mxu0 0.0
    %134 = vmatpush1.msra.mxu0 0.0
    %135 = vmatprep.subr.mxu0 0.0
    %136 = vmatpush1.msra.mxu0 0.0
    %137 = vmatprep.subr.mxu0 0.0
    %138 = vmatpush1.msra.mxu0 0.0
    %139 = vmatprep.subr.mxu0 0.0
    %140 = vmatpush1.msra.mxu0 0.0
    %141 = vmatprep.subr.mxu0 0.0
    %142 = vmatpush1.msra.mxu0 0.0
    %143 = vmatprep.subr.mxu0 0.0
    %144 = vmatpush1.msra.mxu0 0.0
    %145 = vmatprep.subr.mxu0 0.0
    %146 = vmatpush1.msra.mxu0 0.0
    %147 = vmatprep.subr.mxu0 0.0
    %148 = vmatpush1.msra.mxu0 0.0
    %149 = vmatprep.subr.mxu0 0.0
    %150 = vmatpush1.msra.mxu0 0.0
    %151 = vmatprep.subr.mxu0 0.0
    %152 = vmatpush1.msra.mxu0 0.0
    %153 = vmatprep.subr.mxu0 0.0
    %154 = vmatpush1.msra.mxu0 %v109
    %155 = vmatprep.subr.mxu0 0.0
    %156 = vmatpush2.msra.mxu0 0.0
    %157 = vmatprep.subr.mxu0 0.0
    %158 = vmatpush2.msra.mxu0 0.0
    %159 = vmatprep.subr.mxu0 0.0
    %160 = vmatpush2.msra.mxu0 0.0
    %161 = vmatprep.subr.mxu0 0.0
    %162 = vmatpush2.msra.mxu0 0.0
    %163 = vmatprep.subr.mxu0 0.0
    %164 = vmatpush2.msra.mxu0 0.0
    %165 = vmatprep.subr.mxu0 0.0
    %166 = vmatpush2.msra.mxu0 0.0
    %167 = vmatprep.subr.mxu0 0.0
    %168 = vmatpush2.msra.mxu0 0.0
    %169 = vmatprep.subr.mxu0 0.0
    %170 = vmatpush2.msra.mxu0 0.0
    %171 = vmatprep.subr.mxu0 0.0
    %172 = vmatpush2.msra.mxu0 0.0
    %173 = vmatprep.subr.mxu0 0.0
    %174 = vmatpush2.msra.mxu0 0.0
    %175 = vmatprep.subr.mxu0 0.0
    %176 = vmatpush2.msra.mxu0 0.0
    %177 = vmatprep.subr.mxu0 0.0
    %178 = vmatpush2.msra.mxu0 0.0
    %179 = vmatprep.subr.mxu0 0.0
    %180 = vmatpush2.msra.mxu0 0.0
    %181 = vmatprep.subr.mxu0 0.0
    %182 = vmatpush2.msra.mxu0 0.0
    %183 = vmatprep.subr.mxu0 0.0
    %184 = vmatpush2.msra.mxu0 0.0
    %185 = vmatprep.subr.mxu0 0.0
    %186 = vmatpush2.msra.mxu0 0.0
    %187 = vmatprep.mubr.f32.mxu0 0.0
    %188 = vmatmul.mubr.f32.gmra.mxu0 %v121
    %v189 = vpop.f32.mrf.mxu0
    %v190 = vadd.f32 %v117, %v189
    %v191 = vpop.f32.mrf.mxu0
    %192 = vdwg.mxu0
    %v193 = vmax.f32 %v190, 0.0
    %v194 = vld [vmem:[%s4] sm:$0xff]
    %v195 = vld [vmem:[%s4 + $0x8] sm:$0xff]
    %vm196 = vcmask 130048
    %v198 = vsel %vm196, %v193, 0
    %200 = vmatprep.subr.mxu0 0.0
    %201 = vmatpush1.msra.mxu0 0.0
    %202 = vmatprep.subr.mxu0 0.0
    %203 = vmatpush1.msra.mxu0 0.0
    %204 = vmatprep.subr.mxu0 0.0
    %205 = vmatpush1.msra.mxu0 0.0
    %206 = vmatprep.subr.mxu0 0.0
    %207 = vmatpush1.msra.mxu0 0.0
    %208 = vmatprep.subr.mxu0 0.0
    %209 = vmatpush1.msra.mxu0 0.0
    %210 = vmatprep.subr.mxu0 0.0
    %211 = vmatpush1.msra.mxu0 0.0
    %212 = vmatprep.subr.mxu0 0.0
    %213 = vmatpush1.msra.mxu0 0.0
    %214 = vmatprep.subr.mxu0 0.0
    %215 = vmatpush1.msra.mxu0 0.0
    %216 = vmatprep.subr.mxu0 0.0
    %217 = vmatpush1.msra.mxu0 0.0
    %218 = vmatprep.subr.mxu0 0.0
    %219 = vmatpush1.msra.mxu0 0.0
    %220 = vmatprep.subr.mxu0 0.0
    %221 = vmatpush1.msra.mxu0 0.0
    %222 = vmatprep.subr.mxu0 0.0
    %223 = vmatpush1.msra.mxu0 0.0
    %224 = vmatprep.subr.mxu0 0.0
    %225 = vmatpush1.msra.mxu0 0.0
    %226 = vmatprep.subr.mxu0 0.0
    %227 = vmatpush1.msra.mxu0 0.0
    %228 = vmatprep.subr.mxu0 0.0
    %229 = vmatpush1.msra.mxu0 %v195
    %230 = vmatprep.subr.mxu0 0.0
    %231 = vmatpush1.msra.mxu0 %v194
    %232 = vmatprep.subr.mxu0 0.0
    %233 = vmatpush2.msra.mxu0 0.0
    %234 = vmatprep.subr.mxu0 0.0
    %235 = vmatpush2.msra.mxu0 0.0
    %236 = vmatprep.subr.mxu0 0.0
    %237 = vmatpush2.msra.mxu0 0.0
    %238 = vmatprep.subr.mxu0 0.0
    %239 = vmatpush2.msra.mxu0 0.0
    %240 = vmatprep.subr.mxu0 0.0
    %241 = vmatpush2.msra.mxu0 0.0
    %242 = vmatprep.subr.mxu0 0.0
    %243 = vmatpush2.msra.mxu0 0.0
    %244 = vmatprep.subr.mxu0 0.0
    %245 = vmatpush2.msra.mxu0 0.0
    %246 = vmatprep.subr.mxu0 0.0
    %247 = vmatpush2.msra.mxu0 0.0
    %248 = vmatprep.subr.mxu0 0.0
    %249 = vmatpush2.msra.mxu0 0.0
    %250 = vmatprep.subr.mxu0 0.0
    %251 = vmatpush2.msra.mxu0 0.0
    %252 = vmatprep.subr.mxu0 0.0
    %253 = vmatpush2.msra.mxu0 0.0
    %254 = vmatprep.subr.mxu0 0.0
    %255 = vmatpush2.msra.mxu0 0.0
    %256 = vmatprep.subr.mxu0 0.0
    %257 = vmatpush2.msra.mxu0 0.0
    %258 = vmatprep.subr.mxu0 0.0
    %259 = vmatpush2.msra.mxu0 0.0
    %260 = vmatprep.subr.mxu0 0.0
    %261 = vmatpush2.msra.mxu0 0.0
    %262 = vmatprep.subr.mxu0 0.0
    %263 = vmatpush2.msra.mxu0 0.0
    %264 = vmatprep.mubr.f32.mxu0 0.0
    %265 = vmatmul.mubr.f32.gmra.mxu0 %v198
    %v266 = vpop.f32.mrf.mxu0
    %v267 = vadd.f32 0.0, %v266
    %v268 = vpop.f32.mrf.mxu0
    %269 = vdwg.mxu0
    %v270 = vld [vmem:[%s5] sm:$0x1]
    %v272 = vlaneseq
    %v273 = vshrl.u32 %v272, 7
    %v274 = vsub.s32 0, %v273
    %v275 = vrot.slane %v270, %v274
    %277 = vmatprep.subr.mxu0 0.0
    %278 = vmatpush1.msra.mxu0 0.0
    %279 = vmatprep.subr.mxu0 0.0
    %280 = vmatpush1.msra.mxu0 0.0
    %281 = vmatprep.subr.mxu0 0.0
    %282 = vmatpush1.msra.mxu0 0.0
    %283 = vmatprep.subr.mxu0 0.0
    %284 = vmatpush1.msra.mxu0 0.0
    %285 = vmatprep.subr.mxu0 0.0
    %286 = vmatpush1.msra.mxu0 0.0
    %287 = vmatprep.subr.mxu0 0.0
    %288 = vmatpush1.msra.mxu0 0.0
    %289 = vmatprep.subr.mxu0 0.0
    %290 = vmatpush1.msra.mxu0 0.0
    %291 = vmatprep.subr.mxu0 0.0
    %292 = vmatpush1.msra.mxu0 0.0
    %293 = vmatprep.subr.mxu0 0.0
    %294 = vmatpush1.msra.mxu0 0.0
    %295 = vmatprep.subr.mxu0 0.0
    %296 = vmatpush1.msra.mxu0 0.0
    %297 = vmatprep.subr.mxu0 0.0
    %298 = vmatpush1.msra.mxu0 0.0
    %299 = vmatprep.subr.mxu0 0.0
    %300 = vmatpush1.msra.mxu0 0.0
    %301 = vmatprep.subr.mxu0 0.0
    %302 = vmatpush1.msra.mxu0 0.0
    %303 = vmatprep.subr.mxu0 0.0
    %304 = vmatpush1.msra.mxu0 0.0
    %305 = vmatprep.subr.mxu0 0.0
    %306 = vmatpush1.msra.mxu0 0.0
    %307 = vmatprep.subr.mxu0 0.0
    %308 = vmatpush1.msra.mxu0 %v267
    %309 = vmatprep.subr.mxu0 0.0
    %310 = vmatpush2.msra.mxu0 0.0
    %311 = vmatprep.subr.mxu0 0.0
    %312 = vmatpush2.msra.mxu0 0.0
    %313 = vmatprep.subr.mxu0 0.0
    %314 = vmatpush2.msra.mxu0 0.0
    %315 = vmatprep.subr.mxu0 0.0
    %316 = vmatpush2.msra.mxu0 0.0
    %317 = vmatprep.subr.mxu0 0.0
    %318 = vmatpush2.msra.mxu0 0.0
    %319 = vmatprep.subr.mxu0 0.0
    %320 = vmatpush2.msra.mxu0 0.0
    %321 = vmatprep.subr.mxu0 0.0
    %322 = vmatpush2.msra.mxu0 0.0
    %323 = vmatprep.subr.mxu0 0.0
    %324 = vmatpush2.msra.mxu0 0.0
    %325 = vmatprep.subr.mxu0 0.0
    %326 = vmatpush2.msra.mxu0 0.0
    %327 = vmatprep.subr.mxu0 0.0
    %328 = vmatpush2.msra.mxu0 0.0
    %329 = vmatprep.subr.mxu0 0.0
    %330 = vmatpush2.msra.mxu0 0.0
    %331 = vmatprep.subr.mxu0 0.0
    %332 = vmatpush2.msra.mxu0 0.0
    %333 = vmatprep.subr.mxu0 0.0
    %334 = vmatpush2.msra.mxu0 0.0
    %335 = vmatprep.subr.mxu0 0.0
    %336 = vmatpush2.msra.mxu0 0.0
    %337 = vmatprep.subr.mxu0 0.0
    %338 = vmatpush2.msra.mxu0 0.0
    %339 = vmatprep.subr.mxu0 0.0
    %340 = vmatpush2.msra.mxu0 0.0
    %341 = vmatprep.mubr.f32.mxu0 0.0
    %342 = vmatmul.mubr.f32.gmra.mxu0 %v121
    %v343 = vpop.f32.mrf.mxu0
    %v344 = vadd.f32 %v275, %v343
    %v345 = vpop.f32.mrf.mxu0
    %346 = vdwg.mxu0
    %v347 = vmax.f32 %v344, 0.0
    %v349 = vsel %vm119, %v347, 0
    %351 = vmatprep.subr.mxu0 0.0
    %352 = vmatpush1.msra.mxu0 0.0
    %353 = vmatprep.subr.mxu0 0.0
    %354 = vmatpush1.msra.mxu0 0.0
    %355 = vmatprep.subr.mxu0 0.0
    %356 = vmatpush1.msra.mxu0 0.0
    %357 = vmatprep.subr.mxu0 0.0
    %358 = vmatpush1.msra.mxu0 0.0
    %359 = vmatprep.subr.mxu0 0.0
    %360 = vmatpush1.msra.mxu0 0.0
    %361 = vmatprep.subr.mxu0 0.0
    %362 = vmatpush1.msra.mxu0 0.0
    %363 = vmatprep.subr.mxu0 0.0
    %364 = vmatpush1.msra.mxu0 0.0
    %365 = vmatprep.subr.mxu0 0.0
    %366 = vmatpush1.msra.mxu0 0.0
    %367 = vmatprep.subr.mxu0 0.0
    %368 = vmatpush1.msra.mxu0 0.0
    %369 = vmatprep.subr.mxu0 0.0
    %370 = vmatpush1.msra.mxu0 0.0
    %371 = vmatprep.subr.mxu0 0.0
    %372 = vmatpush1.msra.mxu0 0.0
    %373 = vmatprep.subr.mxu0 0.0
    %374 = vmatpush1.msra.mxu0 0.0
    %375 = vmatprep.subr.mxu0 0.0
    %376 = vmatpush1.msra.mxu0 0.0
    %377 = vmatprep.subr.mxu0 0.0
    %378 = vmatpush1.msra.mxu0 0.0
    %379 = vmatprep.subr.mxu0 0.0
    %380 = vmatpush1.msra.mxu0 0.0
    %381 = vmatprep.subr.mxu0 0.0
    %382 = vmatpush1.msra.mxu0 %v31
    %383 = vmatprep.subr.mxu0 0.0
    %384 = vmatpush2.msra.mxu0 0.0
    %385 = vmatprep.subr.mxu0 0.0
    %386 = vmatpush2.msra.mxu0 0.0
    %387 = vmatprep.subr.mxu0 0.0
    %388 = vmatpush2.msra.mxu0 0.0
    %389 = vmatprep.subr.mxu0 0.0
    %390 = vmatpush2.msra.mxu0 0.0
    %391 = vmatprep.subr.mxu0 0.0
    %392 = vmatpush2.msra.mxu0 0.0
    %393 = vmatprep.subr.mxu0 0.0
    %394 = vmatpush2.msra.mxu0 0.0
    %395 = vmatprep.subr.mxu0 0.0
    %396 = vmatpush2.msra.mxu0 0.0
    %397 = vmatprep.subr.mxu0 0.0
    %398 = vmatpush2.msra.mxu0 0.0
    %399 = vmatprep.subr.mxu0 0.0
    %400 = vmatpush2.msra.mxu0 0.0
    %401 = vmatprep.subr.mxu0 0.0
    %402 = vmatpush2.msra.mxu0 0.0
    %403 = vmatprep.subr.mxu0 0.0
    %404 = vmatpush2.msra.mxu0 0.0
    %405 = vmatprep.subr.mxu0 0.0
    %406 = vmatpush2.msra.mxu0 0.0
    %407 = vmatprep.subr.mxu0 0.0
    %408 = vmatpush2.msra.mxu0 0.0
    %409 = vmatprep.subr.mxu0 0.0
    %410 = vmatpush2.msra.mxu0 0.0
    %411 = vmatprep.subr.mxu0 0.0
    %412 = vmatpush2.msra.mxu0 0.0
    %413 = vmatprep.subr.mxu0 0.0
    %414 = vmatpush2.msra.mxu0 0.0
    %415 = vmatprep.mubr.f32.mxu0 0.0
    %416 = vmatmul.mubr.f32.gmra.mxu0 %v349
    %v417 = vpop.f32.mrf.mxu0
    %v418 = vadd.f32 0.0, %v417
    %v419 = vpop.f32.mrf.mxu0
    %420 = vdwg.mxu0
    %v422 = vlaneseq
    %v423 = vshrl.u32 %v422, 7
    %v424 = vsub.s32 0, %v423
    %v425 = vrot.slane %v32, %v424
    %427 = vmatprep.subr.mxu0 0.0
    %428 = vmatpush1.msra.mxu0 0.0
    %429 = vmatprep.subr.mxu0 0.0
    %430 = vmatpush1.msra.mxu0 0.0
    %431 = vmatprep.subr.mxu0 0.0
    %432 = vmatpush1.msra.mxu0 0.0
    %433 = vmatprep.subr.mxu0 0.0
    %434 = vmatpush1.msra.mxu0 0.0
    %435 = vmatprep.subr.mxu0 0.0
    %436 = vmatpush1.msra.mxu0 0.0
    %437 = vmatprep.subr.mxu0 0.0
    %438 = vmatpush1.msra.mxu0 0.0
    %439 = vmatprep.subr.mxu0 0.0
    %440 = vmatpush1.msra.mxu0 0.0
    %441 = vmatprep.subr.mxu0 0.0
    %442 = vmatpush1.msra.mxu0 0.0
    %443 = vmatprep.subr.mxu0 0.0
    %444 = vmatpush1.msra.mxu0 0.0
    %445 = vmatprep.subr.mxu0 0.0
    %446 = vmatpush1.msra.mxu0 0.0
    %447 = vmatprep.subr.mxu0 0.0
    %448 = vmatpush1.msra.mxu0 0.0
    %449 = vmatprep.subr.mxu0 0.0
    %450 = vmatpush1.msra.mxu0 0.0
    %451 = vmatprep.subr.mxu0 0.0
    %452 = vmatpush1.msra.mxu0 0.0
    %453 = vmatprep.subr.mxu0 0.0
    %454 = vmatpush1.msra.mxu0 0.0
    %455 = vmatprep.subr.mxu0 0.0
    %456 = vmatpush1.msra.mxu0 0.0
    %457 = vmatprep.subr.mxu0 0.0
    %458 = vmatpush1.msra.mxu0 %v418
    %459 = vmatprep.subr.mxu0 0.0
    %460 = vmatpush2.msra.mxu0 0.0
    %461 = vmatprep.subr.mxu0 0.0
    %462 = vmatpush2.msra.mxu0 0.0
    %463 = vmatprep.subr.mxu0 0.0
    %464 = vmatpush2.msra.mxu0 0.0
    %465 = vmatprep.subr.mxu0 0.0
    %466 = vmatpush2.msra.mxu0 0.0
    %467 = vmatprep.subr.mxu0 0.0
    %468 = vmatpush2.msra.mxu0 0.0
    %469 = vmatprep.subr.mxu0 0.0
    %470 = vmatpush2.msra.mxu0 0.0
    %471 = vmatprep.subr.mxu0 0.0
    %472 = vmatpush2.msra.mxu0 0.0
    %473 = vmatprep.subr.mxu0 0.0
    %474 = vmatpush2.msra.mxu0 0.0
    %475 = vmatprep.subr.mxu0 0.0
    %476 = vmatpush2.msra.mxu0 0.0
    %477 = vmatprep.subr.mxu0 0.0
    %478 = vmatpush2.msra.mxu0 0.0
    %479 = vmatprep.subr.mxu0 0.0
    %480 = vmatpush2.msra.mxu0 0.0
    %481 = vmatprep.subr.mxu0 0.0
    %482 = vmatpush2.msra.mxu0 0.0
    %483 = vmatprep.subr.mxu0 0.0
    %484 = vmatpush2.msra.mxu0 0.0
    %485 = vmatprep.subr.mxu0 0.0
    %486 = vmatpush2.msra.mxu0 0.0
    %487 = vmatprep.subr.mxu0 0.0
    %488 = vmatpush2.msra.mxu0 0.0
    %489 = vmatprep.subr.mxu0 0.0
    %490 = vmatpush2.msra.mxu0 0.0
    %491 = vmatprep.mubr.f32.mxu0 0.0
    %492 = vmatmul.mubr.f32.gmra.mxu0 %v121
    %v493 = vpop.f32.mrf.mxu0
    %v494 = vadd.f32 %v425, %v493
    %v495 = vpop.f32.mrf.mxu0
    %496 = vdwg.mxu0
    %v497 = vmax.f32 %v494, 0.0
    %v499 = vsel %vm119, %v497, 0
    %501 = vmatprep.subr.mxu0 0.0
    %502 = vmatpush1.msra.mxu0 0.0
    %503 = vmatprep.subr.mxu0 0.0
    %504 = vmatpush1.msra.mxu0 0.0
    %505 = vmatprep.subr.mxu0 0.0
    %506 = vmatpush1.msra.mxu0 0.0
    %507 = vmatprep.subr.mxu0 0.0
    %508 = vmatpush1.msra.mxu0 0.0
    %509 = vmatprep.subr.mxu0 0.0
    %510 = vmatpush1.msra.mxu0 0.0
    %511 = vmatprep.subr.mxu0 0.0
    %512 = vmatpush1.msra.mxu0 0.0
    %513 = vmatprep.subr.mxu0 0.0
    %514 = vmatpush1.msra.mxu0 0.0
    %515 = vmatprep.subr.mxu0 0.0
    %516 = vmatpush1.msra.mxu0 0.0
    %517 = vmatprep.subr.mxu0 0.0
    %518 = vmatpush1.msra.mxu0 0.0
    %519 = vmatprep.subr.mxu0 0.0
    %520 = vmatpush1.msra.mxu0 0.0
    %521 = vmatprep.subr.mxu0 0.0
    %522 = vmatpush1.msra.mxu0 0.0
    %523 = vmatprep.subr.mxu0 0.0
    %524 = vmatpush1.msra.mxu0 0.0
    %525 = vmatprep.subr.mxu0 0.0
    %526 = vmatpush1.msra.mxu0 0.0
    %527 = vmatprep.subr.mxu0 0.0
    %528 = vmatpush1.msra.mxu0 0.0
    %529 = vmatprep.subr.mxu0 0.0
    %530 = vmatpush1.msra.mxu0 0.0
    %531 = vmatprep.subr.mxu0 0.0
    %532 = vmatpush1.msra.mxu0 %v31
    %533 = vmatprep.subr.mxu0 0.0
    %534 = vmatpush2.msra.mxu0 0.0
    %535 = vmatprep.subr.mxu0 0.0
    %536 = vmatpush2.msra.mxu0 0.0
    %537 = vmatprep.subr.mxu0 0.0
    %538 = vmatpush2.msra.mxu0 0.0
    %539 = vmatprep.subr.mxu0 0.0
    %540 = vmatpush2.msra.mxu0 0.0
    %541 = vmatprep.subr.mxu0 0.0
    %542 = vmatpush2.msra.mxu0 0.0
    %543 = vmatprep.subr.mxu0 0.0
    %544 = vmatpush2.msra.mxu0 0.0
    %545 = vmatprep.subr.mxu0 0.0
    %546 = vmatpush2.msra.mxu0 0.0
    %547 = vmatprep.subr.mxu0 0.0
    %548 = vmatpush2.msra.mxu0 0.0
    %549 = vmatprep.subr.mxu0 0.0
    %550 = vmatpush2.msra.mxu0 0.0
    %551 = vmatprep.subr.mxu0 0.0
    %552 = vmatpush2.msra.mxu0 0.0
    %553 = vmatprep.subr.mxu0 0.0
    %554 = vmatpush2.msra.mxu0 0.0
    %555 = vmatprep.subr.mxu0 0.0
    %556 = vmatpush2.msra.mxu0 0.0
    %557 = vmatprep.subr.mxu0 0.0
    %558 = vmatpush2.msra.mxu0 0.0
    %559 = vmatprep.subr.mxu0 0.0
    %560 = vmatpush2.msra.mxu0 0.0
    %561 = vmatprep.subr.mxu0 0.0
    %562 = vmatpush2.msra.mxu0 0.0
    %563 = vmatprep.subr.mxu0 0.0
    %564 = vmatpush2.msra.mxu0 0.0
    %565 = vmatprep.mubr.f32.mxu0 0.0
    %566 = vmatmul.mubr.f32.gmra.mxu0 %v499
    %v567 = vpop.f32.mrf.mxu0
    %v568 = vadd.f32 0.0, %v567
    %v569 = vpop.f32.mrf.mxu0
    %570 = vdwg.mxu0
    %571 = vmatprep.subr.mxu0 0.0
    %572 = vmatpush1.msra.mxu0 0.0
    %573 = vmatprep.subr.mxu0 0.0
    %574 = vmatpush1.msra.mxu0 0.0
    %575 = vmatprep.subr.mxu0 0.0
    %576 = vmatpush1.msra.mxu0 0.0
    %577 = vmatprep.subr.mxu0 0.0
    %578 = vmatpush1.msra.mxu0 0.0
    %579 = vmatprep.subr.mxu0 0.0
    %580 = vmatpush1.msra.mxu0 0.0
    %581 = vmatprep.subr.mxu0 0.0
    %582 = vmatpush1.msra.mxu0 0.0
    %583 = vmatprep.subr.mxu0 0.0
    %584 = vmatpush1.msra.mxu0 0.0
    %585 = vmatprep.subr.mxu0 0.0
    %586 = vmatpush1.msra.mxu0 0.0
    %587 = vmatprep.subr.mxu0 0.0
    %588 = vmatpush1.msra.mxu0 0.0
    %589 = vmatprep.subr.mxu0 0.0
    %590 = vmatpush1.msra.mxu0 0.0
    %591 = vmatprep.subr.mxu0 0.0
    %592 = vmatpush1.msra.mxu0 0.0
    %593 = vmatprep.subr.mxu0 0.0
    %594 = vmatpush1.msra.mxu0 0.0
    %595 = vmatprep.subr.mxu0 0.0
    %596 = vmatpush1.msra.mxu0 0.0
    %597 = vmatprep.subr.mxu0 0.0
    %598 = vmatpush1.msra.mxu0 0.0
    %599 = vmatprep.subr.mxu0 0.0
    %600 = vmatpush1.msra.mxu0 0.0
    %601 = vmatprep.subr.mxu0 0.0
    %602 = vmatpush1.msra.mxu0 %v568
    %603 = vmatprep.subr.mxu0 0.0
    %604 = vmatpush2.msra.mxu0 0.0
    %605 = vmatprep.subr.mxu0 0.0
    %606 = vmatpush2.msra.mxu0 0.0
    %607 = vmatprep.subr.mxu0 0.0
    %608 = vmatpush2.msra.mxu0 0.0
    %609 = vmatprep.subr.mxu0 0.0
    %610 = vmatpush2.msra.mxu0 0.0
    %611 = vmatprep.subr.mxu0 0.0
    %612 = vmatpush2.msra.mxu0 0.0
    %613 = vmatprep.subr.mxu0 0.0
    %614 = vmatpush2.msra.mxu0 0.0
    %615 = vmatprep.subr.mxu0 0.0
    %616 = vmatpush2.msra.mxu0 0.0
    %617 = vmatprep.subr.mxu0 0.0
    %618 = vmatpush2.msra.mxu0 0.0
    %619 = vmatprep.subr.mxu0 0.0
    %620 = vmatpush2.msra.mxu0 0.0
    %621 = vmatprep.subr.mxu0 0.0
    %622 = vmatpush2.msra.mxu0 0.0
    %623 = vmatprep.subr.mxu0 0.0
    %624 = vmatpush2.msra.mxu0 0.0
    %625 = vmatprep.subr.mxu0 0.0
    %626 = vmatpush2.msra.mxu0 0.0
    %627 = vmatprep.subr.mxu0 0.0
    %628 = vmatpush2.msra.mxu0 0.0
    %629 = vmatprep.subr.mxu0 0.0
    %630 = vmatpush2.msra.mxu0 0.0
    %631 = vmatprep.subr.mxu0 0.0
    %632 = vmatpush2.msra.mxu0 0.0
    %633 = vmatprep.subr.mxu0 0.0
    %634 = vmatpush2.msra.mxu0 0.0
    %635 = vmatprep.mubr.f32.mxu0 0.0
    %636 = vmatmul.mubr.f32.gmra.mxu0 %v121
    %v637 = vpop.f32.mrf.mxu0
    %v638 = vadd.f32 %v425, %v637
    %v639 = vpop.f32.mrf.mxu0
    %640 = vdwg.mxu0
    %v641 = vmax.f32 %v638, 0.0
    %642 = vst.msk [vmem:[#allocation2] sm:$0xff] %vm119, %v347
    %643 = vst.msk [vmem:[#allocation2 + $0x8] sm:$0xff] %vm119, %v497
    %644 = vst.msk [vmem:[#allocation2 + $0x10] sm:$0xff] %vm119, %v641
    // Predicated region
    $region34: #{student_lr_fused.1} parent=1 // pred_check
      _
    $region35: #{student_lr_fused.1} parent=1 // pred_check_branch
      %646 = sbr.rel (0) target = $region37
    $region36: #{student_lr_fused.1} parent=1 // pred_region
      %s648 = ssub.s32 384, 384
      %649 = vsyncadd [#allocation3], %s648
      %s650 = sshll.u32 [#allocation2], 4
      %s651 = int_to_ptr.vmem [resolvable:$true] %s650
      %656 = dma.vmem_to_hbm [thread:$0]  %s651, 384, %s8, [#allocation3], 128, 128, 8
    $region37: #{student_lr_fused.1} parent=1 // pred_fallthru
      _
    // Predicated region
    $region38: #{student_lr_fused.1} parent=1 // pred_check
      _
    $region39: #{student_lr_fused.1} parent=1 // pred_check_branch
      %658 = sbr.rel (0) target = $region41
    $region40: #{student_lr_fused.1} parent=1 // pred_region
      %659 = dma.done [#allocation3], 384
    $region41: #{student_lr_fused.1} parent=1 // pred_fallthru
      _
    %660 = vsyncpa [#allocation3], 1

</llo_original>
